<compile_context>
chip_gen: v6e
topology: v6e:2x2x1
jax: 0.10.0
libtpu: 0.0.40
codegen_flags: <defaults>
</compile_context>

<pallas_src>
import math
from functools import partial

import jax
import jax.numpy as jnp
from jax.experimental import pallas as pl
from jax.experimental.pallas import tpu as pltpu

N_PAD = 128        # lane-dense padded head dimension
EMB = 32           # state embedding width (Linear(1, 32))


# ----------------------------------------------------------------------------
# Pallas kernel:
#   emb        = relu(state * w0 + b0)          (VPU broadcast, no MXU)
#   logits_all = emb @ wh_pad + bh_pad          (one MXU matmul, 128 lanes)
# ----------------------------------------------------------------------------
def _controller_kernel(state_ref, w0_ref, b0_ref, wh_ref, bh_ref, out_ref):
    s = state_ref[...]                                   # (TB, 1)  f32
    # K=1 contraction == outer product: do it on the VPU, not the MXU.
    emb = jnp.maximum(s * w0_ref[...] + b0_ref[...], 0.0)   # (TB, 32)
    logits = jnp.dot(emb, wh_ref[...], preferred_element_type=jnp.float32)
    out_ref[...] = logits + bh_ref[...]                  # (TB, 128)


def _pallas_controller(state_p, w0, b0, wh_pad, bh_pad, *, tb):
    """state_p: (B_pad, 1) with B_pad % tb == 0 and tb % 8 == 0."""
    b_pad = state_p.shape[0]
    grid = (b_pad // tb,)
    return pl.pallas_call(
        _controller_kernel,
        out_shape=jax.ShapeDtypeStruct((b_pad, N_PAD), jnp.float32),
        grid=grid,
        in_specs=[
            pl.BlockSpec((tb, 1), lambda i: (i, 0)),        # state tile
            pl.BlockSpec((1, EMB), lambda i: (0, 0)),       # w0   (resident)
            pl.BlockSpec((1, EMB), lambda i: (0, 0)),       # b0   (resident)
            pl.BlockSpec((EMB, N_PAD), lambda i: (0, 0)),   # wh   (resident)
            pl.BlockSpec((1, N_PAD), lambda i: (0, 0)),     # bh   (resident)
        ],
        out_specs=pl.BlockSpec((tb, N_PAD), lambda i: (i, 0)),
        compiler_params=pltpu.CompilerParams(
            dimension_semantics=("parallel",)),             # 2-TC shard on v7x
    )(state_p, w0, b0, wh_pad, bh_pad)


# ----------------------------------------------------------------------------
# Jitted end-to-end forward: pad batch, run kernel, slice per-head logits.
# ----------------------------------------------------------------------------
@partial(jax.jit, static_argnames=("head_sizes",))
def controller_apply(state, w0, b0, wh_pad, bh_pad, head_sizes):
    B = state.shape[0]
    # Pad batch to a sublane multiple; tile large batches over the grid.
    b8 = ((B + 7) // 8) * 8
    tb = min(b8, 512)                       # <= 512 rows/block: tiny VMEM use
    b_pad = ((b8 + tb - 1) // tb) * tb
    if b_pad != B:
        state_p = jnp.zeros((b_pad, 1), state.dtype).at[:B, :].set(state)
    else:
        state_p = state

    out = _pallas_controller(state_p, w0, b0, wh_pad, bh_pad, tb=tb)
    out = out[:B]                           # drop batch padding

    # Slice real (unpadded) head logits; padded lanes (>= sum(head_sizes)) are
    # zero-weight/zero-bias and are never exposed.
    outs, off = [], 0
    for n in head_sizes:
        outs.append(out[:, off:off + n])
        off += n
    return tuple(outs)


# ----------------------------------------------------------------------------
# Deterministic parameter init (PyTorch nn.Linear-style uniform(-1/sqrt(fan_in)))
# ----------------------------------------------------------------------------
def _linear_params(key, fan_in, fan_out):
    kw, kb = jax.random.split(key)
    bound = 1.0 / math.sqrt(fan_in)
    w = jax.random.uniform(kw, (fan_in, fan_out), jnp.float32, -bound, bound)
    b = jax.random.uniform(kb, (1, fan_out), jnp.float32, -bound, bound)
    return w, b


class MultiHeadRLControllerPallas:
    def __init__(self, encoder_choices, pooling_choices, readout_choices,
                 augment_choices, hidden_dims, dropouts, lrs, bn_onoff,
                 temp_choices, key):
        self.head_sizes = tuple([
            len(encoder_choices), len(pooling_choices), len(readout_choices),
            len(augment_choices), len(hidden_dims), len(dropouts),
            len(lrs), len(bn_onoff), len(temp_choices),
        ])
        self.total = sum(self.head_sizes)
        assert self.total <= N_PAD

        keys = jax.random.split(key, 1 + len(self.head_sizes))
        # state_embed: Linear(1, 32). w0 kept as (1, 32), b0 as (1, 32) so the
        # kernel's bias add is a cheap sublane broadcast.
        self.w0, self.b0 = _linear_params(keys[0], 1, EMB)

        # 9 heads: Linear(32, n_i), concatenated along output dim and
        # zero-padded to a lane-dense 128-wide slab.
        ws, bs = [], []
        for k, n in zip(keys[1:], self.head_sizes):
            w, b = _linear_params(k, EMB, n)
            ws.append(w)
            bs.append(b)
        wh = jnp.concatenate(ws, axis=1)            # (32, total)
        bh = jnp.concatenate(bs, axis=1)            # (1, total)
        self.wh_pad = jnp.zeros((EMB, N_PAD), jnp.float32).at[:, :self.total].set(wh)
        self.bh_pad = jnp.zeros((1, N_PAD), jnp.float32).at[:, :self.total].set(bh)

    def forward(self, state):
        return controller_apply(state, self.w0, self.b0,
                                self.wh_pad, self.bh_pad, self.head_sizes)


# ----------------------------------------------------------------------------
# Pure-JAX reference for correctness check
# ----------------------------------------------------------------------------
def _ref_forward(state, w0, b0, wh_pad, bh_pad, total):
    emb = jnp.maximum(state @ w0 + b0, 0.0)
    return (emb @ wh_pad + bh_pad)[:, :total]


if __name__ == "__main__":
    key = jax.random.PRNGKey(0)
    k_params, k_state = jax.random.split(key)

    # choice lists consistent with the PyTorch module's constructor
    encoder_choices = ["gcn", "gat", "sage"]
    pooling_choices = ["mean", "max", "sum"]
    readout_choices = ["linear", "mlp"]
    augment_choices = ["none", "drop_edge", "drop_node", "feat_mask"]
    hidden_dims = [64, 128, 256]
    dropouts = [0.0, 0.2, 0.5]
    lrs = [1e-3, 5e-4, 1e-4]
    bn_onoff = [True, False]
    temp_choices = [0.5, 1.0, 2.0]

    ctrl = MultiHeadRLControllerPallas(
        encoder_choices, pooling_choices, readout_choices, augment_choices,
        hidden_dims, dropouts, lrs, bn_onoff, temp_choices, k_params)

    B = 2
    state = jax.random.normal(k_state, (B, 1), dtype=jnp.float32)

    logits_list = ctrl.forward(state)
    logits_list = [jax.block_until_ready(l) for l in logits_list]

    # sanity-check shapes and values against pure-JAX reference
    ref_all = _ref_forward(state, ctrl.w0, ctrl.b0, ctrl.wh_pad, ctrl.bh_pad,
                           ctrl.total)
    got_all = jnp.concatenate(logits_list, axis=1)
    assert got_all.shape == ref_all.shape
    assert jnp.allclose(got_all, ref_all, atol=1e-5, rtol=1e-5)
    for l, n in zip(logits_list, ctrl.head_sizes):
        assert l.shape == (B, n)

    print("KERNEL_OK")
</pallas_src>

<mosaic_0001>
module attributes {stable_mosaic.version = 11 : i64} {
  func.func @_controller_kernel(%arg0: i32, %arg1: memref<8x1xf32, #tpu.memory_space<vmem>>, %arg2: memref<1x32xf32, #tpu.memory_space<vmem>>, %arg3: memref<1x32xf32, #tpu.memory_space<vmem>>, %arg4: memref<32x128xf32, #tpu.memory_space<vmem>>, %arg5: memref<1x128xf32, #tpu.memory_space<vmem>>, %arg6: memref<8x128xf32, #tpu.memory_space<vmem>>) attributes {dimension_semantics = [#tpu.dimension_semantics<parallel>], iteration_bounds = array<i64: 1>, scalar_prefetch = 0 : i64, scratch_operands = 0 : i64, tpu.core_type = #tpu.core_type<tc>, window_params = [{transform_indices = @transform_0, window_bounds = array<i64: 8, 1>}, {pipeline_mode = #tpu.pipeline_mode<synchronous>, transform_indices = @transform_1, window_bounds = array<i64: 1, 32>}, {pipeline_mode = #tpu.pipeline_mode<synchronous>, transform_indices = @transform_2, window_bounds = array<i64: 1, 32>}, {pipeline_mode = #tpu.pipeline_mode<synchronous>, transform_indices = @transform_3, window_bounds = array<i64: 32, 128>}, {pipeline_mode = #tpu.pipeline_mode<synchronous>, transform_indices = @transform_4, window_bounds = array<i64: 1, 128>}, {transform_indices = @transform_5, window_bounds = array<i64: 8, 128>}]} {
    %c0 = arith.constant 0 : index
    %c0_0 = arith.constant 0 : index
    %0 = vector.load %arg1[%c0, %c0_0] : memref<8x1xf32, #tpu.memory_space<vmem>>, vector<8x1xf32>
    %c0_1 = arith.constant 0 : index
    %c0_2 = arith.constant 0 : index
    %1 = vector.load %arg2[%c0_1, %c0_2] : memref<1x32xf32, #tpu.memory_space<vmem>>, vector<1x32xf32>
    %2 = vector.broadcast %0 : vector<8x1xf32> to vector<8x32xf32>
    %3 = vector.broadcast %1 : vector<1x32xf32> to vector<8x32xf32>
    %4 = arith.mulf %2, %3 : vector<8x32xf32>
    %c0_3 = arith.constant 0 : index
    %c0_4 = arith.constant 0 : index
    %5 = vector.load %arg3[%c0_3, %c0_4] : memref<1x32xf32, #tpu.memory_space<vmem>>, vector<1x32xf32>
    %6 = vector.broadcast %5 : vector<1x32xf32> to vector<8x32xf32>
    %7 = arith.addf %4, %6 : vector<8x32xf32>
    %cst = arith.constant 0.000000e+00 : f32
    %8 = vector.broadcast %cst : f32 to vector<8x32xf32>
    %9 = arith.maximumf %7, %8 : vector<8x32xf32>
    %c0_5 = arith.constant 0 : index
    %c0_6 = arith.constant 0 : index
    %10 = vector.load %arg4[%c0_5, %c0_6] : memref<32x128xf32, #tpu.memory_space<vmem>>, vector<32x128xf32>
    %cst_7 = arith.constant dense<0.000000e+00> : vector<8x128xf32>
    %11 = tpu.matmul %9, %10, %cst_7 {dimension_numbers = #tpu.dot_dimension_numbers<[1], [0], [0], [1], [0, 0, 1, 1], [], []>} : vector<8x32xf32>, vector<32x128xf32>, vector<8x128xf32> -> vector<8x128xf32>
    %c0_8 = arith.constant 0 : index
    %c0_9 = arith.constant 0 : index
    %12 = vector.load %arg5[%c0_8, %c0_9] : memref<1x128xf32, #tpu.memory_space<vmem>>, vector<1x128xf32>
    %13 = vector.broadcast %12 : vector<1x128xf32> to vector<8x128xf32>
    %14 = arith.addf %11, %13 : vector<8x128xf32>
    %c0_10 = arith.constant 0 : index
    %c0_11 = arith.constant 0 : index
    %15 = vector.load %arg6[%c0_10, %c0_11] : memref<8x128xf32, #tpu.memory_space<vmem>>, vector<8x128xf32>
    tpu.vector_store %arg6[%c0_10, %c0_11], %14 {strides = array<i32>} : memref<8x128xf32, #tpu.memory_space<vmem>>, vector<8x128xf32>,
    return
  }
  func.func @transform_0(%arg0: i32) -> (i32, i32) {
    %c0_i32 = arith.constant 0 : i32
    %c0_i32_0 = arith.constant 0 : i32
    return %arg0, %c0_i32 : i32, i32
  }
  func.func @transform_1(%arg0: i32) -> (i32, i32) {
    %c0_i32 = arith.constant 0 : i32
    %c0_i32_0 = arith.constant 0 : i32
    %c0_i32_1 = arith.constant 0 : i32
    return %c0_i32, %c0_i32_0 : i32, i32
  }
  func.func @transform_2(%arg0: i32) -> (i32, i32) {
    %c0_i32 = arith.constant 0 : i32
    %c0_i32_0 = arith.constant 0 : i32
    %c0_i32_1 = arith.constant 0 : i32
    return %c0_i32, %c0_i32_0 : i32, i32
  }
  func.func @transform_3(%arg0: i32) -> (i32, i32) {
    %c0_i32 = arith.constant 0 : i32
    %c0_i32_0 = arith.constant 0 : i32
    %c0_i32_1 = arith.constant 0 : i32
    return %c0_i32, %c0_i32_0 : i32, i32
  }
  func.func @transform_4(%arg0: i32) -> (i32, i32) {
    %c0_i32 = arith.constant 0 : i32
    %c0_i32_0 = arith.constant 0 : i32
    %c0_i32_1 = arith.constant 0 : i32
    return %c0_i32, %c0_i32_0 : i32, i32
  }
  func.func @transform_5(%arg0: i32) -> (i32, i32) {
    %c0_i32 = arith.constant 0 : i32
    %c0_i32_0 = arith.constant 0 : i32
    return %arg0, %c0_i32 : i32, i32
  }
}

</mosaic_0001>

<llo_original>
// kernel: controller_apply.1
$region0: #{controller_apply.1}
  #allocation0 [shape = 'u32[]', space=smem, size = 0x4, offset = 0x4, fixed_abs, tag = 'smem constant byte address 0x4 - core index']
  #allocation1 [shape = 'u32[144,128]{1,0:T(1,128)}', space=vmem, size = 0x12000, scoped, tag = 'internal scratch']
  %s0 = inlined_call_operand.vmem [shape: f32[8,1], index: 0, kind: input, shape index: {}]
  %s1 = inlined_call_operand.vmem [shape: f32[1,32], index: 1, kind: input, shape index: {}]
  %s2 = inlined_call_operand.vmem [shape: f32[1,32], index: 2, kind: input, shape index: {}]
  %s3 = inlined_call_operand.hbm [shape: f32[32,128], index: 3, kind: input, shape index: {}]
  %s4 = inlined_call_operand.vmem [shape: f32[1,128], index: 4, kind: input, shape index: {}]
  %s5 = inlined_call_operand.vmem [shape: f32[8,128], index: 5, kind: output, shape index: {}]
  %s6 = sld [smem:[#allocation0]]
  $region34: #{controller_apply.1} parent=0
    _
  %s8 = ssub.s32 1, %s6
  %s9 = scalar_select 0, %s8, %s6
  $region1: #{controller_apply.1} parent=0
    #allocation2 [shape = 'u8[16384]{0}', space=vmem, size = 0x4000, scoped, tag = 'input window, operand 3, single buffered']
    #allocation3 [shape = 's32[1]{0}', space=sflag, size = 0x4, scoped, tag = 'scoped memory for controller_apply.1']
    %10 = vsyncpa [#allocation3], 0
    // Predicated region
    $region2: #{controller_apply.1} parent=1 // pred_check
      _
    $region3: #{controller_apply.1} parent=1 // pred_check_branch
      %12 = sbr.rel (0) target = $region5
    $region4: #{controller_apply.1} parent=1 // pred_region
      _
    $region5: #{controller_apply.1} parent=1 // pred_fallthru
      _
    // Predicated region
    $region6: #{controller_apply.1} parent=1 // pred_check
      _
    $region7: #{controller_apply.1} parent=1 // pred_check_branch
      %14 = sbr.rel (0) target = $region9
    $region8: #{controller_apply.1} parent=1 // pred_region
      _
    $region9: #{controller_apply.1} parent=1 // pred_fallthru
      _
    // Predicated region
    $region10: #{controller_apply.1} parent=1 // pred_check
      _
    $region11: #{controller_apply.1} parent=1 // pred_check_branch
      %16 = sbr.rel (0) target = $region13
    $region12: #{controller_apply.1} parent=1 // pred_region
      _
    $region13: #{controller_apply.1} parent=1 // pred_fallthru
      _
    // Predicated region
    $region14: #{controller_apply.1} parent=1 // pred_check
      _
    $region15: #{controller_apply.1} parent=1 // pred_check_branch
      %18 = sbr.rel (0) target = $region17
    $region16: #{controller_apply.1} parent=1 // pred_region
      %s20 = ssub.s32 512, 512
      %21 = vsyncadd [#allocation3], %s20
      %s22 = sshll.u32 [#allocation2], 4
      %s23 = int_to_ptr.vmem [resolvable:$true] %s22
      %28 = dma.hbm_to_vmem [thread:$0]  %s3, 512, %s23, [#allocation3], 128, 128, 8
    $region17: #{controller_apply.1} parent=1 // pred_fallthru
      _
    // Predicated region
    $region18: #{controller_apply.1} parent=1 // pred_check
      _
    $region19: #{controller_apply.1} parent=1 // pred_check_branch
      %30 = sbr.rel (0) target = $region21
    $region20: #{controller_apply.1} parent=1 // pred_region
      _
    $region21: #{controller_apply.1} parent=1 // pred_fallthru
      _
    // Predicated region
    $region22: #{controller_apply.1} parent=1 // pred_check
      _
    $region23: #{controller_apply.1} parent=1 // pred_check_branch
      %32 = sbr.rel (0) target = $region25
    $region24: #{controller_apply.1} parent=1 // pred_region
      %33 = dma.done [#allocation3], 512
    $region25: #{controller_apply.1} parent=1 // pred_fallthru
      _
    %v34 = vld [vmem:[%s0] sm:$0xff]
    %v35 = vld [vmem:[%s1] sm:$0x1]
    %37 = vset.pattern.permute.xlu0 0
    %38 = vperm.xlu0 %37, %v34
    %v39 = vpop.permute.xlu0 %38
    %v42 = vlaneseq
    %v43 = vshrl.u32 %v42, 7
    %v44 = vsub.s32 0, %v43
    %v45 = vrot.slane %v35, %v44
    %v47 = vmul.f32 %v39, %v45
    %v48 = vld [vmem:[%s2] sm:$0x1]
    %v50 = vlaneseq
    %v51 = vshrl.u32 %v50, 7
    %v52 = vsub.s32 0, %v51
    %v53 = vrot.slane %v48, %v52
    %v55 = vadd.f32 %v47, %v53
    %v56 = vmax.f32 %v55, 0.0
    %v57 = vld [vmem:[#allocation2] sm:$0xff]
    %v58 = vld [vmem:[#allocation2 + $0x8] sm:$0xff]
    %v59 = vld [vmem:[#allocation2 + $0x10] sm:$0xff]
    %v60 = vld [vmem:[#allocation2 + $0x18] sm:$0xff]
    %v61 = vld [vmem:[%s4] sm:$0x1]
    %v63 = vlaneseq
    %v64 = vshrl.u32 %v63, 7
    %v65 = vsub.s32 0, %v64
    %v66 = vrot.slane %v61, %v65
    %vm68 = vcmask 261120
    %v70 = vsel %vm68, %v56, 0
    %72 = vmatprep.subr.mxu0 0.0
    %73 = vmatpush1.msra.mxu0 0.0
    %74 = vmatprep.subr.mxu0 0.0
    %75 = vmatpush1.msra.mxu0 0.0
    %76 = vmatprep.subr.mxu0 0.0
    %77 = vmatpush1.msra.mxu0 0.0
    %78 = vmatprep.subr.mxu0 0.0
    %79 = vmatpush1.msra.mxu0 0.0
    %80 = vmatprep.subr.mxu0 0.0
    %81 = vmatpush1.msra.mxu0 0.0
    %82 = vmatprep.subr.mxu0 0.0
    %83 = vmatpush1.msra.mxu0 0.0
    %84 = vmatprep.subr.mxu0 0.0
    %85 = vmatpush1.msra.mxu0 0.0
    %86 = vmatprep.subr.mxu0 0.0
    %87 = vmatpush1.msra.mxu0 0.0
    %88 = vmatprep.subr.mxu0 0.0
    %89 = vmatpush1.msra.mxu0 0.0
    %90 = vmatprep.subr.mxu0 0.0
    %91 = vmatpush1.msra.mxu0 0.0
    %92 = vmatprep.subr.mxu0 0.0
    %93 = vmatpush1.msra.mxu0 0.0
    %94 = vmatprep.subr.mxu0 0.0
    %95 = vmatpush1.msra.mxu0 0.0
    %96 = vmatprep.subr.mxu0 0.0
    %97 = vmatpush1.msra.mxu0 %v60
    %98 = vmatprep.subr.mxu0 0.0
    %99 = vmatpush1.msra.mxu0 %v59
    %100 = vmatprep.subr.mxu0 0.0
    %101 = vmatpush1.msra.mxu0 %v58
    %102 = vmatprep.subr.mxu0 0.0
    %103 = vmatpush1.msra.mxu0 %v57
    %104 = vmatprep.subr.mxu0 0.0
    %105 = vmatpush2.msra.mxu0 0.0
    %106 = vmatprep.subr.mxu0 0.0
    %107 = vmatpush2.msra.mxu0 0.0
    %108 = vmatprep.subr.mxu0 0.0
    %109 = vmatpush2.msra.mxu0 0.0
    %110 = vmatprep.subr.mxu0 0.0
    %111 = vmatpush2.msra.mxu0 0.0
    %112 = vmatprep.subr.mxu0 0.0
    %113 = vmatpush2.msra.mxu0 0.0
    %114 = vmatprep.subr.mxu0 0.0
    %115 = vmatpush2.msra.mxu0 0.0
    %116 = vmatprep.subr.mxu0 0.0
    %117 = vmatpush2.msra.mxu0 0.0
    %118 = vmatprep.subr.mxu0 0.0
    %119 = vmatpush2.msra.mxu0 0.0
    %120 = vmatprep.subr.mxu0 0.0
    %121 = vmatpush2.msra.mxu0 0.0
    %122 = vmatprep.subr.mxu0 0.0
    %123 = vmatpush2.msra.mxu0 0.0
    %124 = vmatprep.subr.mxu0 0.0
    %125 = vmatpush2.msra.mxu0 0.0
    %126 = vmatprep.subr.mxu0 0.0
    %127 = vmatpush2.msra.mxu0 0.0
    %128 = vmatprep.subr.mxu0 0.0
    %129 = vmatpush2.msra.mxu0 0.0
    %130 = vmatprep.subr.mxu0 0.0
    %131 = vmatpush2.msra.mxu0 0.0
    %132 = vmatprep.subr.mxu0 0.0
    %133 = vmatpush2.msra.mxu0 0.0
    %134 = vmatprep.subr.mxu0 0.0
    %135 = vmatpush2.msra.mxu0 0.0
    %136 = vmatprep.mubr.f32.mxu0 0.0
    %137 = vmatmul.mubr.f32.gmra.mxu0 %v70
    %v138 = vpop.f32.mrf.mxu0
    %v139 = vadd.f32 %v66, %v138
    %v140 = vpop.f32.mrf.mxu0
    %141 = vdwg.mxu0
    %142 = vst [vmem:[%s5] sm:$0xff] %v139
    // Predicated region
    $region26: #{controller_apply.1} parent=1 // pred_check
      _
    $region27: #{controller_apply.1} parent=1 // pred_check_branch
      %144 = sbr.rel (0) target = $region29
    $region28: #{controller_apply.1} parent=1 // pred_region
      _
    $region29: #{controller_apply.1} parent=1 // pred_fallthru
      _
    // Predicated region
    $region30: #{controller_apply.1} parent=1 // pred_check
      _
    $region31: #{controller_apply.1} parent=1 // pred_check_branch
      %146 = sbr.rel (0) target = $region33
    $region32: #{controller_apply.1} parent=1 // pred_region
      _
    $region33: #{controller_apply.1} parent=1 // pred_fallthru
      _
    %147 = vsyncpa [#allocation3], 1

</llo_original>
